<compile_context>
chip_gen: v7x
topology: tpu7x:2x2x1
jax: 0.10.0
libtpu: 0.0.40
codegen_flags: <defaults>
</compile_context>

<pallas_src>
import math
import functools

import jax
import jax.numpy as jnp
from jax import lax
from jax.experimental import pallas as pl
from jax.experimental.pallas import tpu as pltpu

NEG_INF = -1e30          # large finite negative: robust vs exp(-inf - -inf) NaNs


# ----------------------------- helpers -----------------------------

def _round_up(x, m):
    return (x + m - 1) // m * m


def _tile_dim(dim, cap, align):
    """Tile size + padded extent for one dimension.  A full-extent block is always
    legal regardless of (8,128) alignment; otherwise the tile is align-multiple."""
    if dim <= cap:
        return dim, dim
    t = max(align, (cap // align) * align)
    return t, _round_up(dim, t)


def _pick_seq_tile(n, cap):
    """Largest tile <= cap that divides n and is a multiple of 8 (or == n)."""
    t = min(cap, n)
    for cand in range(t, 0, -1):
        if n % cand == 0 and (cand % 8 == 0 or cand == n):
            return cand
    return n


def _buf_bytes(shape, dtype):
    return math.prod(shape) * jnp.dtype(dtype).itemsize


def _vmem_limit(in_out_blocks, scratch_blocks, headroom=8 << 20):
    """Double-buffered pipeline blocks + scratch + headroom, capped at v7x's 64 MiB."""
    need = sum(2 * _buf_bytes(s, d) for s, d in in_out_blocks)
    need += sum(_buf_bytes(s, d) for s, d in scratch_blocks)
    return int(min(64 << 20, max(need + headroom, 16 << 20)))


# ----------------------------- linear -----------------------------

def linear_kernel(x_ref, w_ref, b_ref, o_ref, acc_ref):
    """o = x @ w.T + b, K-tiled with a resident f32 accumulator.  w keeps its
    PyTorch (N, K) layout — the MXU contracts trailing axes natively."""
    @pl.when(pl.program_id(2) == 0)
    def _():
        acc_ref[...] = jnp.zeros_like(acc_ref)

    acc_ref[...] += lax.dot_general(
        x_ref[...], w_ref[...], (((1,), (1,)), ((), ())),
        preferred_element_type=jnp.float32)

    @pl.when(pl.program_id(2) == pl.num_programs(2) - 1)
    def _():
        o_ref[...] = (acc_ref[...] + b_ref[...]).astype(o_ref.dtype)


def prepare_linear(w, b, *, tn_cap=512, tk_cap=1024, dtype=jnp.bfloat16):
    """One-time weight prep (hoisted out of the forward pass): keep (N, K) layout,
    pad to tile multiples, cast to bf16."""
    n_out, k_dim = w.shape
    tn, n_pad = _tile_dim(n_out, tn_cap, 128)
    tk, k_pad = _tile_dim(k_dim, tk_cap, 128)
    w_p = jnp.pad(w, ((0, n_pad - n_out), (0, k_pad - k_dim))).astype(dtype)
    b_p = jnp.pad(b, (0, n_pad - n_out)).reshape(1, n_pad).astype(jnp.float32)
    return {"w": w_p, "b": b_p, "n_out": n_out, "k_dim": k_dim, "tn": tn, "tk": tk}


def linear(x2d, lp, *, tm_cap=256, out_dtype=jnp.bfloat16):
    """y = x2d @ w.T + b using a pre-prepared (padded, bf16, (N,K)-layout) weight."""
    m, k_dim = x2d.shape
    w_p, b_p = lp["w"], lp["b"]
    n_pad, k_pad = w_p.shape
    tn, tk, n_out = lp["tn"], lp["tk"], lp["n_out"]
    assert k_dim == lp["k_dim"]
    tm, m_pad = _tile_dim(m, tm_cap, 8)

    x_p = x2d.astype(w_p.dtype)                     # bf16 operands for the MXU
    if (m_pad, k_pad) != (m, k_dim):
        x_p = jnp.pad(x_p, ((0, m_pad - m), (0, k_pad - k_dim)))

    limit = _vmem_limit(
        [((tm, tk), w_p.dtype), ((tn, tk), w_p.dtype), ((1, tn), jnp.float32),
         ((tm, tn), out_dtype)],
        [((tm, tn), jnp.float32)])

    out = pl.pallas_call(
        linear_kernel,
        out_shape=jax.ShapeDtypeStruct((m_pad, n_pad), out_dtype),
        grid=(m_pad // tm, n_pad // tn, k_pad // tk),
        in_specs=[
            pl.BlockSpec((tm, tk), lambda i, j, kk: (i, kk)),
            pl.BlockSpec((tn, tk), lambda i, j, kk: (j, kk)),
            pl.BlockSpec((1, tn), lambda i, j, kk: (0, j)),
        ],
        out_specs=pl.BlockSpec((tm, tn), lambda i, j, kk: (i, j)),
        scratch_shapes=[pltpu.VMEM((tm, tn), jnp.float32)],
        compiler_params=pltpu.CompilerParams(
            dimension_semantics=("parallel", "parallel", "arbitrary"),
            vmem_limit_bytes=limit),
    )(x_p, w_p, b_p)
    if (m_pad, n_pad) != (m, n_out):
        out = out[:m, :n_out]
    return out


# ----------------------------- flash attention (with fused RoPE) -----------------------------

def flash_attn_kernel(q_ref, k_ref, v_ref, cos_q_ref, sin_q_ref,
                      cos_k_ref, sin_k_ref, rot_ref, o_ref,
                      m_sc, l_sc, acc_sc, q_sc,
                      *, scale, sq, sk, n_rep, n_kv_heads, d_k):
    # q/o block: (1, sq, n_heads, d_k)   k/v block: (1, sk, n_kv_heads, d_k)
    qi = pl.program_id(0)
    ki = pl.program_id(2)
    mf = n_rep * sq
    rot = rot_ref[...]                       # (d_k, d_k) signed pair-swap (+/-1)

    @pl.when(ki == 0)
    def _():
        m_sc[...] = jnp.full_like(m_sc, NEG_INF)
        l_sc[...] = jnp.zeros_like(l_sc)
        acc_sc[...] = jnp.zeros_like(acc_sc)
        # Fused RoPE + softmax scale on q, once per q tile (not per KV block).
        cos3 = cos_q_ref[...].reshape(sq, 1, d_k)
        sin3 = sin_q_ref[...].reshape(sq, 1, d_k)
        for g in range(n_kv_heads):
            qg = q_ref[0, :, g * n_rep:(g + 1) * n_rep, :]           # (sq, n_rep, d_k)
            qsw = jnp.dot(qg.reshape(mf, d_k), rot,
                          preferred_element_type=jnp.float32).reshape(sq, n_rep, d_k)
            q_ro = qg.astype(jnp.float32) * cos3 + qsw * sin3
            q_sc[g] = (q_ro.reshape(mf, d_k) * scale).astype(q_sc.dtype)

    def process(apply_mask):
        cosk = cos_k_ref[...]                                        # (sk, d_k) f32
        sink = sin_k_ref[...]
        if apply_mask:
            # In-kernel causal mask, no integer mod/div, only on diagonal blocks.
            q_pos = qi * sq + lax.broadcasted_iota(
                jnp.int32, (sq, n_rep, sk), 0).reshape(mf, sk)
            k_pos = ki * sk + lax.broadcasted_iota(jnp.int32, (mf, sk), 1)
            keep = q_pos >= k_pos
        for g in range(n_kv_heads):
            kg = k_ref[0, :, g, :]                                   # (sk, d_k) bf16
            ksw = jnp.dot(kg, rot, preferred_element_type=jnp.float32)
            kg = (kg.astype(jnp.float32) * cosk + ksw * sink).astype(kg.dtype)
            # Contract trailing d_k of both operands — no K^T relayout; f32 accumulate.
            s = lax.dot_general(q_sc[g], kg, (((1,), (1,)), ((), ())),
                                preferred_element_type=jnp.float32)   # (mf, sk)
            if apply_mask:
                s = jnp.where(keep, s, NEG_INF)
            m_prev = m_sc[g]
            m_new = jnp.maximum(m_prev, jnp.max(s, axis=-1, keepdims=True))
            alpha = jnp.exp(m_prev - m_new)
            p = jnp.exp(s - m_new)
            l_sc[g] = alpha * l_sc[g] + jnp.sum(p, axis=-1, keepdims=True)
            vg = v_ref[0, :, g, :]
            acc_sc[g] = alpha * acc_sc[g] + lax.dot_general(
                p.astype(vg.dtype), vg, (((1,), (0,)), ((), ())),
                preferred_element_type=jnp.float32)
            m_sc[g] = m_new

    is_live = qi * sq + (sq - 1) >= ki * sk
    is_diag = jnp.logical_and(is_live, ki * sk + (sk - 1) > qi * sq)
    is_full = jnp.logical_and(is_live, jnp.logical_not(is_diag))

    @pl.when(is_full)            # fully below the diagonal: no mask work at all
    def _():
        process(apply_mask=False)

    @pl.when(is_diag)            # straddles the diagonal: masked path
    def _():
        process(apply_mask=True)

    @pl.when(ki == pl.num_programs(2) - 1)
    def _():
        for g in range(n_kv_heads):
            inv_l = pl.reciprocal(l_sc[g], approx=True)              # EUP slot
            out = (acc_sc[g] * inv_l).reshape(sq, n_rep, d_k)
            o_ref[0, :, g * n_rep:(g + 1) * n_rep, :] = out.astype(o_ref.dtype)


def scaled_dot_product_attention(q, k, v, cos_t, sin_t, rot, *, sq_cap=256, sk_cap=512):
    """Causal GQA flash attention over the (bs, S, H, d_k) layout the projections
    produce (no HBM transposes); RoPE for q/k fused in-kernel.
    v5e note: 128-multiple sq/sk are enough (4x128^2 MXU); v6e/v7x like sk>=256."""
    bs, s_len, n_heads, d_k = q.shape
    n_kv_heads = k.shape[2]
    n_rep = n_heads // n_kv_heads
    sq = _pick_seq_tile(s_len, sq_cap)
    sk = _pick_seq_tile(s_len, sk_cap)
    nq, nk = s_len // sq, s_len // sk
    mf = n_rep * sq
    scale = 1.0 / math.sqrt(d_k)

    def kv_block(qi, ki):
        # Clamp to the last causally-needed KV block: repeated block indices make
        # the pipeliner elide the DMA of blocks entirely above the diagonal.
        return jnp.minimum(ki, (qi * sq + sq - 1) // sk)

    kern = functools.partial(flash_attn_kernel, scale=scale, sq=sq, sk=sk,
                             n_rep=n_rep, n_kv_heads=n_kv_heads, d_k=d_k)

    limit = _vmem_limit(
        [((1, sq, n_heads, d_k), q.dtype), ((1, sk, n_kv_heads, d_k), k.dtype),
         ((1, sk, n_kv_heads, d_k), v.dtype), ((sq, d_k), cos_t.dtype),
         ((sq, d_k), sin_t.dtype), ((sk, d_k), cos_t.dtype), ((sk, d_k), sin_t.dtype),
         ((d_k, d_k), rot.dtype), ((1, sq, n_heads, d_k), q.dtype)],
        [((n_kv_heads, mf, 1), jnp.float32), ((n_kv_heads, mf, 1), jnp.float32),
         ((n_kv_heads, mf, d_k), jnp.float32), ((n_kv_heads, mf, d_k), q.dtype)])

    return pl.pallas_call(
        kern,
        out_shape=jax.ShapeDtypeStruct((bs, s_len, n_heads, d_k), q.dtype),
        grid=(nq, bs, nk),                 # qi leads (megacore), ki innermost (reduction)
        in_specs=[
            pl.BlockSpec((1, sq, n_heads, d_k), lambda qi, b, ki: (b, qi, 0, 0)),
            pl.BlockSpec((1, sk, n_kv_heads, d_k),
                         lambda qi, b, ki: (b, kv_block(qi, ki), 0, 0)),
            pl.BlockSpec((1, sk, n_kv_heads, d_k),
                         lambda qi, b, ki: (b, kv_block(qi, ki), 0, 0)),
            pl.BlockSpec((sq, d_k), lambda qi, b, ki: (qi, 0)),
            pl.BlockSpec((sq, d_k), lambda qi, b, ki: (qi, 0)),
            pl.BlockSpec((sk, d_k), lambda qi, b, ki: (kv_block(qi, ki), 0)),
            pl.BlockSpec((sk, d_k), lambda qi, b, ki: (kv_block(qi, ki), 0)),
            pl.BlockSpec((d_k, d_k), lambda qi, b, ki: (0, 0)),
        ],
        out_specs=pl.BlockSpec((1, sq, n_heads, d_k), lambda qi, b, ki: (b, qi, 0, 0)),
        scratch_shapes=[
            pltpu.VMEM((n_kv_heads, mf, 1), jnp.float32),    # running max
            pltpu.VMEM((n_kv_heads, mf, 1), jnp.float32),    # running denominator
            pltpu.VMEM((n_kv_heads, mf, d_k), jnp.float32),  # output accumulator
            pltpu.VMEM((n_kv_heads, mf, d_k), q.dtype),      # RoPE'd + scaled q (bf16)
        ],
        compiler_params=pltpu.CompilerParams(
            dimension_semantics=("parallel", "parallel", "arbitrary"),
            vmem_limit_bytes=limit),
    )(q, k, v, cos_t, sin_t, cos_t, sin_t, rot)


# ----------------------------- RoPE tables / param prep -----------------------------

def precompute_freqs(d_k, max_seq_len, theta=10000.0):
    inv = 1.0 / (theta ** (jnp.arange(0, d_k, 2, dtype=jnp.float32) / d_k))
    t = jnp.arange(max_seq_len, dtype=jnp.float32)
    f = jnp.outer(t, inv)                      # (max_seq_len, d_k//2)
    return jnp.cos(f), jnp.sin(f)


def prepare_rope(freqs_cos, freqs_sin, seq_len, d_k):
    """Expanded interleaved RoPE tables and the signed pair-swap matrix (built once).
    In-kernel:  rope(x) = x * cos_t + (x @ rot) * sin_t."""
    cos_t = jnp.repeat(freqs_cos[:seq_len], 2, axis=-1).astype(jnp.float32)   # (S, d_k)
    sin_t = jnp.repeat(freqs_sin[:seq_len], 2, axis=-1).astype(jnp.float32)
    i = jnp.arange(d_k)
    rot = jnp.zeros((d_k, d_k), jnp.float32)
    rot = rot.at[i[1::2], i[0::2]].set(-1.0)   # (x@rot)[2i]   = -x[2i+1]
    rot = rot.at[i[0::2], i[1::2]].set(1.0)    # (x@rot)[2i+1] =  x[2i]
    return cos_t, sin_t, rot.astype(jnp.bfloat16)


def prepare_attention(params, freqs_cos, freqs_sin, *, seq_len, n_heads, n_kv_heads):
    """One-time prep: padded bf16 (N,K) weights, f32 biases, RoPE tables."""
    d_model = params["wq_w"].shape[1]
    d_k = d_model // n_heads
    cos_t, sin_t, rot = prepare_rope(freqs_cos, freqs_sin, seq_len, d_k)
    return {
        "wq": prepare_linear(params["wq_w"], params["wq_b"]),
        "wk": prepare_linear(params["wk_w"], params["wk_b"]),
        "wv": prepare_linear(params["wv_w"], params["wv_b"]),
        "wo": prepare_linear(params["wo_w"], params["wo_b"]),
        "cos": cos_t, "sin": sin_t, "rot": rot,
    }


# ----------------------------- forward -----------------------------

def attention_forward(prepped, x, *, n_heads, n_kv_heads, sq_cap=256, sk_cap=512):
    bs, S, d_model = x.shape
    d_k = d_model // n_heads
    x2d = x.reshape(bs * S, d_model).astype(jnp.bfloat16)   # bf16 activations for the MXU

    # (bs, S, H, d_k) layouts straight out of the projections — no transposes.
    q = linear(x2d, prepped["wq"]).reshape(bs, S, n_heads, d_k)
    k = linear(x2d, prepped["wk"]).reshape(bs, S, n_kv_heads, d_k)
    v = linear(x2d, prepped["wv"]).reshape(bs, S, n_kv_heads, d_k)

    out = scaled_dot_product_attention(q, k, v, prepped["cos"], prepped["sin"],
                                       prepped["rot"], sq_cap=sq_cap, sk_cap=sk_cap)

    out2d = out.reshape(bs * S, d_model)                     # (b,s,h,d) -> rows, no transpose
    y = linear(out2d, prepped["wo"], out_dtype=jnp.float32).reshape(bs, S, d_model)
    # TODO(synk): attention dropout & output dropout are eval-mode no-ops.
    return y


# ----------------------------- pure-JAX reference (f32) -----------------------------

def apply_rope(x, freqs_cos, freqs_sin):
    S = x.shape[-2]
    xf = x.astype(jnp.float32).reshape(x.shape[:-1] + (-1, 2))
    x_r, x_i = xf[..., 0], xf[..., 1]
    c = freqs_cos[:S].reshape(1, 1, S, -1)
    s = freqs_sin[:S].reshape(1, 1, S, -1)
    out_r = x_r * c - x_i * s
    out_i = x_r * s + x_i * c
    out = jnp.stack([out_r, out_i], axis=-1).reshape(x.shape)
    return out.astype(x.dtype)


def reference_forward(params, x, freqs_cos, freqs_sin, *, n_heads, n_kv_heads):
    bs, S, d_model = x.shape
    d_k = d_model // n_heads
    n_rep = n_heads // n_kv_heads

    def lin(v2d, w, b):
        return v2d @ w.T + b

    x2d = x.reshape(bs * S, d_model)
    q = lin(x2d, params["wq_w"], params["wq_b"]).reshape(bs, S, n_heads, d_k).transpose(0, 2, 1, 3)
    k = lin(x2d, params["wk_w"], params["wk_b"]).reshape(bs, S, n_kv_heads, d_k).transpose(0, 2, 1, 3)
    v = lin(x2d, params["wv_w"], params["wv_b"]).reshape(bs, S, n_kv_heads, d_k).transpose(0, 2, 1, 3)
    q = apply_rope(q, freqs_cos, freqs_sin)
    k = apply_rope(k, freqs_cos, freqs_sin)
    k = jnp.repeat(k, n_rep, axis=1)
    v = jnp.repeat(v, n_rep, axis=1)
    mask = jnp.triu(jnp.full((S, S), -jnp.inf, dtype=jnp.float32), k=1)
    scores = jnp.einsum("bhqd,bhkd->bhqk", q, k) / math.sqrt(d_k) + mask
    w = jax.nn.softmax(scores, axis=-1)
    out = jnp.einsum("bhqk,bhkd->bhqd", w, v)
    out = out.transpose(0, 2, 1, 3).reshape(bs * S, d_model)
    return lin(out, params["wo_w"], params["wo_b"]).reshape(bs, S, d_model)


# ----------------------------- main -----------------------------

if __name__ == "__main__":
    bs, seq_len, d_model = 2, 16, 64
    n_heads, n_kv_heads = 4, 2
    max_seq_len = 16
    d_k = d_model // n_heads

    key = jax.random.PRNGKey(0)
    keys = jax.random.split(key, 9)

    def init_w(k_, d_out, d_in):
        bound = 1.0 / math.sqrt(d_in)
        return jax.random.uniform(k_, (d_out, d_in), jnp.float32, -bound, bound)

    def init_b(k_, d_out, d_in):
        bound = 1.0 / math.sqrt(d_in)
        return jax.random.uniform(k_, (d_out,), jnp.float32, -bound, bound)

    kv_dim = n_kv_heads * d_k
    params = {
        "wq_w": init_w(keys[0], d_model, d_model), "wq_b": init_b(keys[1], d_model, d_model),
        "wk_w": init_w(keys[2], kv_dim, d_model),  "wk_b": init_b(keys[3], kv_dim, d_model),
        "wv_w": init_w(keys[4], kv_dim, d_model),  "wv_b": init_b(keys[5], kv_dim, d_model),
        "wo_w": init_w(keys[6], d_model, d_model), "wo_b": init_b(keys[7], d_model, d_model),
    }

    x = jax.random.normal(keys[8], (bs, seq_len, d_model), jnp.float32)
    freqs_cos, freqs_sin = precompute_freqs(d_k, max_seq_len)

    y_ref = reference_forward(params, x, freqs_cos, freqs_sin,
                              n_heads=n_heads, n_kv_heads=n_kv_heads)

    prepped = prepare_attention(params, freqs_cos, freqs_sin, seq_len=seq_len,
                                n_heads=n_heads, n_kv_heads=n_kv_heads)

    # Multi-block flash path: 2 q-tiles x 2 kv-tiles exercises the causal skip,
    # the clamped (DMA-elided) K/V index_map, and both masked/unmasked branches.
    y = attention_forward(prepped, x, n_heads=n_heads, n_kv_heads=n_kv_heads,
                          sq_cap=8, sk_cap=8)
    y = jax.block_until_ready(y)
    assert y.shape == (bs, seq_len, d_model)
    assert jnp.allclose(y, y_ref, atol=3e-2, rtol=3e-2), "mismatch vs JAX reference (tiled)"

    # Single-block path (tiles cover the full sequence).
    y2 = attention_forward(prepped, x, n_heads=n_heads, n_kv_heads=n_kv_heads)
    y2 = jax.block_until_ready(y2)
    assert jnp.allclose(y2, y_ref, atol=3e-2, rtol=3e-2), "mismatch vs JAX reference (full)"

    print("KERNEL_OK")
</pallas_src>

<mosaic_0001>
module attributes {stable_mosaic.version = 11 : i64} {
  func.func @linear_kernel(%arg0: i32, %arg1: i32, %arg2: i32, %arg3: memref<32x64xbf16, #tpu.memory_space<vmem>>, %arg4: memref<64x64xbf16, #tpu.memory_space<vmem>>, %arg5: memref<1x64xf32, #tpu.memory_space<vmem>>, %arg6: memref<32x64xbf16, #tpu.memory_space<vmem>>, %arg7: memref<32x64xf32, #tpu.memory_space<vmem>>) attributes {dimension_semantics = [#tpu.dimension_semantics<parallel>, #tpu.dimension_semantics<parallel>, #tpu.dimension_semantics<arbitrary>], iteration_bounds = array<i64: 1, 1, 1>, scalar_prefetch = 0 : i64, scratch_operands = 1 : i64, tpu.core_type = #tpu.core_type<tc>, window_params = [{transform_indices = @transform_0, window_bounds = array<i64: 32, 64>}, {transform_indices = @transform_1, window_bounds = array<i64: 64, 64>}, {transform_indices = @transform_2, window_bounds = array<i64: 1, 64>}, {transform_indices = @transform_3, window_bounds = array<i64: 32, 64>}]} {
    %c0_i32 = arith.constant 0 : i32
    %0 = arith.cmpi eq, %arg2, %c0_i32 : i32
    %1 = arith.extui %0 : i1 to i32
    %c0_i32_0 = arith.constant 0 : i32
    %2 = arith.cmpi ne, %1, %c0_i32_0 : i32
    scf.if %2 {
      %cst_10 = arith.constant 0.000000e+00 : f32
      %12 = vector.broadcast %cst_10 : f32 to vector<32x64xf32>
      %c0_11 = arith.constant 0 : index
      %c0_12 = arith.constant 0 : index
      %13 = vector.load %arg7[%c0_11, %c0_12] : memref<32x64xf32, #tpu.memory_space<vmem>>, vector<32x64xf32>
      tpu.vector_store %arg7[%c0_11, %c0_12], %12 {strides = array<i32>} : memref<32x64xf32, #tpu.memory_space<vmem>>, vector<32x64xf32>,
    } else {
    }
    %c0 = arith.constant 0 : index
    %c0_1 = arith.constant 0 : index
    %3 = vector.load %arg7[%c0, %c0_1] : memref<32x64xf32, #tpu.memory_space<vmem>>, vector<32x64xf32>
    %c0_2 = arith.constant 0 : index
    %c0_3 = arith.constant 0 : index
    %4 = vector.load %arg3[%c0_2, %c0_3] : memref<32x64xbf16, #tpu.memory_space<vmem>>, vector<32x64xbf16>
    %c0_4 = arith.constant 0 : index
    %c0_5 = arith.constant 0 : index
    %5 = vector.load %arg4[%c0_4, %c0_5] : memref<64x64xbf16, #tpu.memory_space<vmem>>, vector<64x64xbf16>
    %cst = arith.constant dense<0.000000e+00> : vector<32x64xf32>
    %6 = tpu.matmul %4, %5, %cst {dimension_numbers = #tpu.dot_dimension_numbers<[1], [1], [0], [0], [0, 0, 1, 0], [], []>} : vector<32x64xbf16>, vector<64x64xbf16>, vector<32x64xf32> -> vector<32x64xf32>
    %7 = arith.addf %3, %6 : vector<32x64xf32>
    %c0_6 = arith.constant 0 : index
    %c0_7 = arith.constant 0 : index
    %8 = vector.load %arg7[%c0_6, %c0_7] : memref<32x64xf32, #tpu.memory_space<vmem>>, vector<32x64xf32>
    tpu.vector_store %arg7[%c0_6, %c0_7], %7 {strides = array<i32>} : memref<32x64xf32, #tpu.memory_space<vmem>>, vector<32x64xf32>,
    %c0_i32_8 = arith.constant 0 : i32
    %9 = arith.cmpi eq, %arg2, %c0_i32_8 : i32
    %10 = arith.extui %9 : i1 to i32
    %c0_i32_9 = arith.constant 0 : i32
    %11 = arith.cmpi ne, %10, %c0_i32_9 : i32
    scf.if %11 {
      %c0_10 = arith.constant 0 : index
      %c0_11 = arith.constant 0 : index
      %12 = vector.load %arg7[%c0_10, %c0_11] : memref<32x64xf32, #tpu.memory_space<vmem>>, vector<32x64xf32>
      %c0_12 = arith.constant 0 : index
      %c0_13 = arith.constant 0 : index
      %13 = vector.load %arg5[%c0_12, %c0_13] : memref<1x64xf32, #tpu.memory_space<vmem>>, vector<1x64xf32>
      %14 = vector.broadcast %13 : vector<1x64xf32> to vector<32x64xf32>
      %15 = arith.addf %12, %14 : vector<32x64xf32>
      %16 = arith.truncf %15 : vector<32x64xf32> to vector<32x64xbf16>
      %c0_14 = arith.constant 0 : index
      %c0_15 = arith.constant 0 : index
      %17 = vector.load %arg6[%c0_14, %c0_15] : memref<32x64xbf16, #tpu.memory_space<vmem>>, vector<32x64xbf16>
      tpu.vector_store %arg6[%c0_14, %c0_15], %16 {strides = array<i32>} : memref<32x64xbf16, #tpu.memory_space<vmem>>, vector<32x64xbf16>,
    } else {
    }
    return
  }
  func.func @transform_0(%arg0: i32, %arg1: i32, %arg2: i32) -> (i32, i32) {
    %c0_i32 = arith.constant 0 : i32
    return %arg0, %arg2 : i32, i32
  }
  func.func @transform_1(%arg0: i32, %arg1: i32, %arg2: i32) -> (i32, i32) {
    %c0_i32 = arith.constant 0 : i32
    return %arg1, %arg2 : i32, i32
  }
  func.func @transform_2(%arg0: i32, %arg1: i32, %arg2: i32) -> (i32, i32) {
    %c0_i32 = arith.constant 0 : i32
    %c0_i32_0 = arith.constant 0 : i32
    return %c0_i32, %arg1 : i32, i32
  }
  func.func @transform_3(%arg0: i32, %arg1: i32, %arg2: i32) -> (i32, i32) {
    %c0_i32 = arith.constant 0 : i32
    return %arg0, %arg1 : i32, i32
  }
}

</mosaic_0001>

<llo_original>
// kernel: tpu_custom_call.1
$region0: #{tpu_custom_call.1}
  #allocation0 [shape = 'u32[]', space=smem, size = 0x4, offset = 0x4, fixed_abs, tag = 'smem constant byte address 0x4 - core index']
  #allocation1 [shape = 'u32[144,128]{1,0:T(1,128)}', space=vmem, size = 0x12000, scoped, tag = 'internal scratch']
  #allocation2 [shape = 'f32[32,64]{1,0:T(8,128)}', space=vmem, size = 0x4000, scoped, tag = 'scratch operand']
  %s0 = inlined_call_operand.hbm [shape: bf16[32,64], index: 0, kind: input, shape index: {}]
  %s1 = inlined_call_operand.hbm [shape: bf16[64,64], index: 1, kind: input, shape index: {}]
  %s2 = inlined_call_operand.vmem [shape: f32[1,64], index: 2, kind: input, shape index: {}]
  %s3 = inlined_call_operand.hbm [shape: bf16[32,64], index: 3, kind: output, shape index: {}]
  %s4 = sld [smem:[#allocation0]]
  $region38: #{tpu_custom_call.1} parent=0
    _
  %s6 = ssub.s32 1, %s4
  %s7 = scalar_select 0, %s6, %s4
  $region1: #{tpu_custom_call.1} parent=0
    #allocation3 [shape = 'u8[8192]{0}', space=vmem, size = 0x2000, scoped, tag = 'input window, operand 0, single buffered']
    #allocation4 [shape = 's32[1]{0}', space=sflag, size = 0x4, scoped, tag = 'scoped memory for tpu_custom_call.1']
    #allocation5 [shape = 's32[1]{0}', space=sflag, size = 0x4, scoped, tag = 'scoped memory for tpu_custom_call.1']
    #allocation6 [shape = 'u8[16384]{0}', space=vmem, size = 0x4000, scoped, tag = 'input window, operand 1, single buffered']
    #allocation7 [shape = 's32[1]{0}', space=sflag, size = 0x4, scoped, tag = 'scoped memory for tpu_custom_call.1']
    #allocation8 [shape = 'u8[8192]{0}', space=vmem, size = 0x2000, scoped, tag = 'output window, operand 0, single buffered']
    %8 = vsyncpa [#allocation4], 0
    %9 = vsyncpa [#allocation7], 0
    %10 = vsyncpa [#allocation5], 0
    // Predicated region
    $region2: #{tpu_custom_call.1} parent=1 // pred_check
      _
    $region3: #{tpu_custom_call.1} parent=1 // pred_check_branch
      %12 = sbr.rel (0) target = $region5
    $region4: #{tpu_custom_call.1} parent=1 // pred_region
      %s14 = ssub.s32 256, 256
      %15 = vsyncadd [#allocation4], %s14
      %s16 = sshll.u32 [#allocation3], 4
      %s17 = int_to_ptr.vmem [resolvable:$true] %s16
      %22 = dma.hbm_to_vmem [thread:$0]  %s0, 256, %s17, [#allocation4], 64, 64, 4
    $region5: #{tpu_custom_call.1} parent=1 // pred_fallthru
      _
    // Predicated region
    $region6: #{tpu_custom_call.1} parent=1 // pred_check
      _
    $region7: #{tpu_custom_call.1} parent=1 // pred_check_branch
      %24 = sbr.rel (0) target = $region9
    $region8: #{tpu_custom_call.1} parent=1 // pred_region
      %s26 = ssub.s32 512, 512
      %27 = vsyncadd [#allocation7], %s26
      %s28 = sshll.u32 [#allocation6], 4
      %s29 = int_to_ptr.vmem [resolvable:$true] %s28
      %34 = dma.hbm_to_vmem [thread:$0]  %s1, 512, %s29, [#allocation7], 64, 64, 4
    $region9: #{tpu_custom_call.1} parent=1 // pred_fallthru
      _
    // Predicated region
    $region10: #{tpu_custom_call.1} parent=1 // pred_check
      _
    $region11: #{tpu_custom_call.1} parent=1 // pred_check_branch
      %36 = sbr.rel (0) target = $region13
    $region12: #{tpu_custom_call.1} parent=1 // pred_region
      _
    $region13: #{tpu_custom_call.1} parent=1 // pred_fallthru
      _
    // Predicated region
    $region14: #{tpu_custom_call.1} parent=1 // pred_check
      _
    $region15: #{tpu_custom_call.1} parent=1 // pred_check_branch
      %38 = sbr.rel (0) target = $region17
    $region16: #{tpu_custom_call.1} parent=1 // pred_region
      %39 = dma.done [#allocation4], 256
    $region17: #{tpu_custom_call.1} parent=1 // pred_fallthru
      _
    // Predicated region
    $region18: #{tpu_custom_call.1} parent=1 // pred_check
      _
    $region19: #{tpu_custom_call.1} parent=1 // pred_check_branch
      %41 = sbr.rel (0) target = $region21
    $region20: #{tpu_custom_call.1} parent=1 // pred_region
      %42 = dma.done [#allocation7], 512
    $region21: #{tpu_custom_call.1} parent=1 // pred_fallthru
      _
    %p44 = scmp.eq.s32.totalorder 0, 0
    // Predicated region
    $region22: #{tpu_custom_call.1} parent=1 // pred_check
      %p45 = pneg %p44
    $region23: #{tpu_custom_call.1} parent=1 // pred_check_branch
      %47 = sbr.rel (%p45) target = $region25
    $region24: #{tpu_custom_call.1} parent=1 // pred_region
      %vm48 = vcmask 523264
      %49 = vst.msk [vmem:[#allocation2] sm:$0xff] %vm48, 0.0
      %50 = vst.msk [vmem:[#allocation2 + $0x8] sm:$0xff] %vm48, 0.0
      %51 = vst.msk [vmem:[#allocation2 + $0x10] sm:$0xff] %vm48, 0.0
      %52 = vst.msk [vmem:[#allocation2 + $0x18] sm:$0xff] %vm48, 0.0
    $region25: #{tpu_custom_call.1} parent=1 // pred_fallthru
      _
    %v53 = vld [vmem:[#allocation2] sm:$0xff]
    %v54 = vld [vmem:[#allocation2 + $0x8] sm:$0xff]
    %v55 = vld [vmem:[#allocation2 + $0x10] sm:$0xff]
    %v56 = vld [vmem:[#allocation2 + $0x18] sm:$0xff]
    %v57 = vld [vmem:[#allocation3] sm:$0xf]
    %v58 = vld [vmem:[#allocation3 + $0x4] sm:$0xf]
    %v59 = vld [vmem:[#allocation3 + $0x8] sm:$0xf]
    %v60 = vld [vmem:[#allocation3 + $0xc] sm:$0xf]
    %v61 = vld [vmem:[#allocation6] sm:$0xf]
    %v62 = vld [vmem:[#allocation6 + $0x4] sm:$0xf]
    %v63 = vld [vmem:[#allocation6 + $0x8] sm:$0xf]
    %v64 = vld [vmem:[#allocation6 + $0xc] sm:$0xf]
    %v65 = vld [vmem:[#allocation6 + $0x10] sm:$0xf]
    %v66 = vld [vmem:[#allocation6 + $0x14] sm:$0xf]
    %v67 = vld [vmem:[#allocation6 + $0x18] sm:$0xf]
    %v68 = vld [vmem:[#allocation6 + $0x1c] sm:$0xf]
    %v73 = vunpack.c.l.b16 %v57
    %v74 = vunpack.c.l.b16 %v58
    %v75 = vunpack.c.l.b16 %v59
    %v76 = vunpack.c.l.b16 %v60
    %v77 = vpack.c.b16 %v74, %v73
    %v78 = vpack.c.b16 %v76, %v75
    %v87 = vunpack.c.l.b16 %v61
    %v88 = vunpack.c.l.b16 %v62
    %v89 = vunpack.c.l.b16 %v63
    %v90 = vunpack.c.l.b16 %v64
    %v91 = vunpack.c.l.b16 %v65
    %v92 = vunpack.c.l.b16 %v66
    %v93 = vunpack.c.l.b16 %v67
    %v94 = vunpack.c.l.b16 %v68
    %v95 = vpack.c.b16 %v88, %v87
    %v96 = vpack.c.b16 %v90, %v89
    %v97 = vpack.c.b16 %v92, %v91
    %v98 = vpack.c.b16 %v94, %v93
    %vm99 = vcmask 523264
    %v101 = vsel %vm99, %v77, 0
    %v104 = vsel %vm99, %v78, 0
    %v107 = vsel %vm99, %v95, 0
    %v110 = vsel %vm99, %v96, 0
    %v113 = vsel %vm99, %v97, 0
    %v116 = vsel %vm99, %v98, 0
    %118 = vmatprep.subr.bf16.mxu0 0
    %119 = vmatpush1.bf16.xpose.msra.mxu0 %v107
    %120 = vmatprep.subr.bf16.mxu0 0
    %121 = vmatpush1.bf16.xpose.msra.mxu0 %v110
    %122 = vmatprep.subr.bf16.mxu0 0
    %123 = vmatpush1.bf16.xpose.msra.mxu0 %v113
    %124 = vmatprep.subr.bf16.mxu0 0
    %125 = vmatpush1.bf16.xpose.msra.mxu0 %v116
    %126 = vmatprep.subr.bf16.mxu0 0
    %127 = vmatpush1.bf16.xpose.msra.mxu0 0
    %128 = vmatprep.subr.bf16.mxu0 0
    %129 = vmatpush1.bf16.xpose.msra.mxu0 0
    %130 = vmatprep.subr.bf16.mxu0 0
    %131 = vmatpush1.bf16.xpose.msra.mxu0 0
    %132 = vmatprep.subr.bf16.mxu0 0
    %133 = vmatpush1.bf16.xpose.msra.mxu0 0
    %134 = vmatprep.subr.bf16.mxu0 0
    %135 = vmatpush1.bf16.xpose.msra.mxu0 0
    %136 = vmatprep.subr.bf16.mxu0 0
    %137 = vmatpush1.bf16.xpose.msra.mxu0 0
    %138 = vmatprep.subr.bf16.mxu0 0
    %139 = vmatpush1.bf16.xpose.msra.mxu0 0
    %140 = vmatprep.subr.bf16.mxu0 0
    %141 = vmatpush1.bf16.xpose.msra.mxu0 0
    %142 = vmatprep.subr.bf16.mxu0 0
    %143 = vmatpush1.bf16.xpose.msra.mxu0 0
    %144 = vmatprep.subr.bf16.mxu0 0
    %145 = vmatpush1.bf16.xpose.msra.mxu0 0
    %146 = vmatprep.subr.bf16.mxu0 0
    %147 = vmatpush1.bf16.xpose.msra.mxu0 0
    %148 = vmatprep.subr.bf16.mxu0 0
    %149 = vmatpush1.bf16.xpose.msra.mxu0 0
    %150 = vmatprep.mubr.bf16.mxu0 0
    %151 = vmatmul.mubr.bf16.gmra.mrb[0].mxu0 %v101
    %v152 = vpop.f32.mrb[0].mxu0
    %v153 = vadd.f32 0.0, %v152
    %v154 = vpop.f32.mrb[0].mxu0
    %v155 = vpop.f32.mrb[0].mxu0
    %v156 = vadd.f32 0.0, %v155
    %v157 = vpop.f32.mrb[0].mxu0
    %158 = vmatprep.mubr.bf16.mxu0 0
    %159 = vmatmul.mubr.bf16.gmra.mrb[0].mxu0 %v104
    %v160 = vpop.f32.mrb[0].mxu0
    %v161 = vadd.f32 0.0, %v160
    %v162 = vpop.f32.mrb[0].mxu0
    %v163 = vpop.f32.mrb[0].mxu0
    %v164 = vadd.f32 0.0, %v163
    %v165 = vpop.f32.mrb[0].mxu0
    %166 = vdwg.mxu0
    %v167 = vadd.f32 %v53, %v153
    %v168 = vadd.f32 %v54, %v156
    %v169 = vadd.f32 %v55, %v161
    %v170 = vadd.f32 %v56, %v164
    %171 = vst.msk [vmem:[#allocation2] sm:$0xff] %vm99, %v167
    %172 = vst.msk [vmem:[#allocation2 + $0x8] sm:$0xff] %vm99, %v168
    %173 = vst.msk [vmem:[#allocation2 + $0x10] sm:$0xff] %vm99, %v169
    %174 = vst.msk [vmem:[#allocation2 + $0x18] sm:$0xff] %vm99, %v170
    // Predicated region
    $region26: #{tpu_custom_call.1} parent=1 // pred_check
      %p175 = pneg %p44
    $region27: #{tpu_custom_call.1} parent=1 // pred_check_branch
      %177 = sbr.rel (%p175) target = $region29
    $region28: #{tpu_custom_call.1} parent=1 // pred_region
      %v178 = vld [vmem:[#allocation2] sm:$0xff]
      %v179 = vld [vmem:[#allocation2 + $0x8] sm:$0xff]
      %v180 = vld [vmem:[#allocation2 + $0x10] sm:$0xff]
      %v181 = vld [vmem:[#allocation2 + $0x18] sm:$0xff]
      %v182 = vld [vmem:[%s2] sm:$0x1]
      %v184 = vlaneseq
      %v185 = vshrl.u32 %v184, 7
      %v186 = vsub.s32 0, %v185
      %v187 = vrot.slane %v182, %v186
      %v189 = vadd.f32 %v178, %v187
      %v190 = vadd.f32 %v179, %v187
      %v191 = vadd.f32 %v180, %v187
      %v192 = vadd.f32 %v181, %v187
      %v193 = vpack.c.bf16 %v190, %v189
      %v194 = vpack.c.bf16 %v192, %v191
      %v197 = vunpack.c.l.b16 %v193
      %v198 = vunpack.c.h.b16 %v193
      %v199 = vunpack.c.l.b16 %v194
      %v200 = vunpack.c.h.b16 %v194
      %v201 = vpack.c.b16 %v197, %v197
      %v202 = vpack.c.b16 %v198, %v198
      %v203 = vpack.c.b16 %v199, %v199
      %v204 = vpack.c.b16 %v200, %v200
      %vm209 = vcmask 519168
      %210 = vst.msk [vmem:[#allocation8] sm:$0xf] %vm209, %v201
      %211 = vst.msk [vmem:[#allocation8 + $0x4] sm:$0xf] %vm209, %v202
      %212 = vst.msk [vmem:[#allocation8 + $0x8] sm:$0xf] %vm209, %v203
      %213 = vst.msk [vmem:[#allocation8 + $0xc] sm:$0xf] %vm209, %v204
    $region29: #{tpu_custom_call.1} parent=1 // pred_fallthru
      _
    // Predicated region
    $region30: #{tpu_custom_call.1} parent=1 // pred_check
      _
    $region31: #{tpu_custom_call.1} parent=1 // pred_check_branch
      %215 = sbr.rel (0) target = $region33
    $region32: #{tpu_custom_call.1} parent=1 // pred_region
      %s217 = ssub.s32 256, 256
      %218 = vsyncadd [#allocation5], %s217
      %s219 = sshll.u32 [#allocation8], 4
      %s220 = int_to_ptr.vmem [resolvable:$true] %s219
      %225 = dma.vmem_to_hbm [thread:$0]  %s220, 256, %s3, [#allocation5], 64, 64, 4
    $region33: #{tpu_custom_call.1} parent=1 // pred_fallthru
      _
    // Predicated region
    $region34: #{tpu_custom_call.1} parent=1 // pred_check
      _
    $region35: #{tpu_custom_call.1} parent=1 // pred_check_branch
      %227 = sbr.rel (0) target = $region37
    $region36: #{tpu_custom_call.1} parent=1 // pred_region
      %228 = dma.done [#allocation5], 256
    $region37: #{tpu_custom_call.1} parent=1 // pred_fallthru
      _
    %229 = vsyncpa [#allocation4], 1
    %230 = vsyncpa [#allocation7], 1
    %231 = vsyncpa [#allocation5], 1

</llo_original>
